<compile_context>
chip_gen: v6e
topology: v6e:2x2x1
jax: 0.10.0
libtpu: 0.0.40
codegen_flags: <defaults>
</compile_context>

<pallas_src>
import functools

import jax
import jax.numpy as jnp
from jax import lax
from jax.experimental import pallas as pl
from jax.experimental.pallas import tpu as pltpu


def _round_up(x, m):
    return (x + m - 1) // m * m


def _pop_pred_kernel(x_ref, w_ref, b_ref, o_ref):
    # x_ref: (tile_b, D) VMEM   -- input rows, D on the lane axis
    # w_ref: (1, D)      VMEM   -- resident weight row
    # b_ref: (1,)        SMEM   -- scalar bias (f32)
    # o_ref: (1, tile_b) VMEM   -- lane-dense output row
    #
    # MXU contraction over D directly yields the lane-dense (1, tile_b) row.
    scores = lax.dot_general(
        w_ref[...], x_ref[...],
        dimension_numbers=(((1,), (1,)), ((), ())),
        preferred_element_type=jnp.float32,
    )
    o_ref[...] = (scores + b_ref[0]).astype(o_ref.dtype)


def _default_tile_b(batch, d, itemsize):
    # Target ~6 MiB of VMEM per pipelined x buffer (x2 for double buffering
    # -> ~12 MiB, under the 16 MiB v5e scoped default and well under v6e/v7x).
    # VMEM footprint is lane-padding aware: a (tile_b, d) block occupies
    # tile_b * round_up(d, 128) * itemsize bytes.
    d_vmem = _round_up(d, 128)
    budget = 6 * 1024 * 1024
    cap_rows = max(128, (budget // max(1, d_vmem * itemsize)) // 128 * 128)
    # Keep >= 2 grid steps whenever the batch allows it so the "parallel" grid
    # axis can be split across both TensorCores on v7x (and stays pipelined).
    half_batch = max(128, _round_up(pl.cdiv(batch, 2), 128))
    return max(128, min(cap_rows, half_batch))


@functools.partial(jax.jit, static_argnames=("tile_b",))
def popularity_predictor(x, weight, bias, *, tile_b=None):
    """x: (..., input_dim); weight: (1, input_dim); bias: (1,) -> (...,)."""
    lead_shape = x.shape[:-1]
    d = x.shape[-1]
    x2 = x.reshape(-1, d)
    batch = x2.shape[0]
    itemsize = jnp.dtype(x.dtype).itemsize

    if tile_b is None:
        tile_b = _default_tile_b(batch, d, itemsize)
    # Lane-dense output tile requires tile_b to be a multiple of 128 (this also
    # satisfies the sublane multiple-of-8 constraint on the x BlockSpec).
    tile_b = max(128, _round_up(int(tile_b), 128))

    # No padding copy of x: the grid overhangs a ragged batch and the trailing
    # partial block's undefined rows produce scores that are sliced off below.
    num_tiles = pl.cdiv(batch, tile_b)
    padded_b = num_tiles * tile_b   # output-only padding (tiny, fresh buffer)

    weight2 = weight.reshape(1, d).astype(x.dtype)
    bias1 = bias.reshape(1).astype(jnp.float32)

    # Explicit scoped-VMEM limit, lane-padding aware, with headroom.
    d_vmem = _round_up(d, 128)
    vmem_needed = 2 * (tile_b * d_vmem * itemsize       # double-buffered x tile
                       + tile_b * 4                     # double-buffered out row
                       + 8 * d_vmem * itemsize)         # weight tile
    vmem_limit = int(min(64 * 1024 * 1024,
                         max(16 * 1024 * 1024, vmem_needed + (2 << 20))))

    out = pl.pallas_call(
        _pop_pred_kernel,
        out_shape=jax.ShapeDtypeStruct((1, padded_b), x.dtype),
        grid_spec=pltpu.PrefetchScalarGridSpec(
            num_scalar_prefetch=0,
            grid=(num_tiles,),
            in_specs=[
                pl.BlockSpec((tile_b, d), lambda i: (i, 0)),        # x tile
                pl.BlockSpec((1, d), lambda i: (0, 0)),             # weight (resident)
                pl.BlockSpec(memory_space=pltpu.MemorySpace.SMEM),  # bias scalar
            ],
            out_specs=pl.BlockSpec((1, tile_b), lambda i: (0, i)),  # lane-dense row
        ),
        compiler_params=pltpu.CompilerParams(
            dimension_semantics=("parallel",),
            vmem_limit_bytes=vmem_limit,
        ),
        cost_estimate=pl.CostEstimate(
            flops=2 * batch * d,
            bytes_accessed=batch * d * itemsize + batch * itemsize,
            transcendentals=0,
        ),
    )(x2, weight2, bias1)

    return out.reshape(padded_b)[:batch].reshape(lead_shape)


if __name__ == "__main__":
    key = jax.random.PRNGKey(0)
    kx, kw, kb, kx2 = jax.random.split(key, 4)

    input_dim = 32
    bound = 1.0 / (input_dim ** 0.5)
    weight = jax.random.uniform(kw, (1, input_dim), jnp.float32, -bound, bound)
    bias = jax.random.uniform(kb, (1,), jnp.float32, -bound, bound)

    def ref_fn(xx):
        # Exact-f32 elementwise reference (avoids default-precision HLO matmul).
        return jnp.sum(xx * weight.reshape(-1), axis=-1) + bias[0]

    # Tolerance documented: the in-kernel contraction runs on the MXU, whose
    # f32 path may use bf16 multi-pass accumulation; for D=32 ranking scores
    # this is well within 1e-2 of the exact f32 result.
    TOL = 1e-2

    # Case 1: small 2-D batch, default tile selection (single grid step,
    # overhanging partial x block of 8 valid rows).
    x = jax.random.normal(kx, (8, input_dim), dtype=jnp.float32)
    scores = jax.block_until_ready(popularity_predictor(x, weight, bias))
    assert scores.shape == (8,)
    assert jnp.allclose(scores, ref_fn(x), atol=TOL, rtol=TOL)

    # Case 2: 3-D input with a ragged flattened batch (200 rows) and explicit
    # tile_b=128 -> multi-step grid with a ragged trailing block (no input pad).
    x3 = jax.random.normal(kx2, (2, 100, input_dim), dtype=jnp.float32)
    scores3 = jax.block_until_ready(
        popularity_predictor(x3, weight, bias, tile_b=128)
    )
    assert scores3.shape == (2, 100)
    assert jnp.allclose(scores3, ref_fn(x3), atol=TOL, rtol=TOL)

    print("KERNEL_OK")
</pallas_src>

<mosaic_0001>
module attributes {stable_mosaic.version = 11 : i64} {
  func.func @_pop_pred_kernel(%arg0: i32, %arg1: memref<128x32xf32, #tpu.memory_space<vmem>>, %arg2: memref<1x32xf32, #tpu.memory_space<vmem>>, %arg3: memref<1xf32, #tpu.memory_space<smem>>, %arg4: memref<1x128xf32, #tpu.memory_space<vmem>>) attributes {dimension_semantics = [#tpu.dimension_semantics<parallel>], iteration_bounds = array<i64: 1>, scalar_prefetch = 0 : i64, scratch_operands = 0 : i64, tpu.core_type = #tpu.core_type<tc>, window_params = [{transform_indices = @transform_0, window_bounds = array<i64: 128, 32>}, {pipeline_mode = #tpu.pipeline_mode<synchronous>, transform_indices = @transform_1, window_bounds = array<i64: 1, 32>}, {transform_indices = @transform_2, window_bounds = array<i64: 1>}, {transform_indices = @transform_3, window_bounds = array<i64: 1, 128>}]} {
    %c0 = arith.constant 0 : index
    %c0_0 = arith.constant 0 : index
    %0 = vector.load %arg2[%c0, %c0_0] : memref<1x32xf32, #tpu.memory_space<vmem>>, vector<1x32xf32>
    %c0_1 = arith.constant 0 : index
    %c0_2 = arith.constant 0 : index
    %1 = vector.load %arg1[%c0_1, %c0_2] : memref<128x32xf32, #tpu.memory_space<vmem>>, vector<128x32xf32>
    %cst = arith.constant dense<0.000000e+00> : vector<1x128xf32>
    %2 = tpu.matmul %0, %1, %cst {dimension_numbers = #tpu.dot_dimension_numbers<[1], [1], [0], [0], [0, 0, 1, 0], [], []>} : vector<1x32xf32>, vector<128x32xf32>, vector<1x128xf32> -> vector<1x128xf32>
    %c0_3 = arith.constant 0 : index
    %3 = memref.load %arg3[%c0_3] : memref<1xf32, #tpu.memory_space<smem>>
    %4 = vector.broadcast %3 : f32 to vector<1x128xf32>
    %5 = arith.addf %2, %4 : vector<1x128xf32>
    %c0_4 = arith.constant 0 : index
    %c0_5 = arith.constant 0 : index
    %6 = vector.load %arg4[%c0_4, %c0_5] : memref<1x128xf32, #tpu.memory_space<vmem>>, vector<1x128xf32>
    tpu.vector_store %arg4[%c0_4, %c0_5], %5 {strides = array<i32>} : memref<1x128xf32, #tpu.memory_space<vmem>>, vector<1x128xf32>,
    return
  }
  func.func @transform_0(%arg0: i32) -> (i32, i32) {
    %c0_i32 = arith.constant 0 : i32
    %c0_i32_0 = arith.constant 0 : i32
    return %arg0, %c0_i32 : i32, i32
  }
  func.func @transform_1(%arg0: i32) -> (i32, i32) {
    %c0_i32 = arith.constant 0 : i32
    %c0_i32_0 = arith.constant 0 : i32
    %c0_i32_1 = arith.constant 0 : i32
    return %c0_i32, %c0_i32_0 : i32, i32
  }
  func.func @transform_2(%arg0: i32) -> i32 {
    %c0_i32 = arith.constant 0 : i32
    %c0_i32_0 = arith.constant 0 : i32
    return %c0_i32 : i32
  }
  func.func @transform_3(%arg0: i32) -> (i32, i32) {
    %c0_i32 = arith.constant 0 : i32
    %c0_i32_0 = arith.constant 0 : i32
    return %c0_i32, %arg0 : i32, i32
  }
}

</mosaic_0001>

<llo_original>
// kernel: popularity_predictor.1
$region0: #{popularity_predictor.1}
  #allocation0 [shape = 'u32[]', space=smem, size = 0x4, offset = 0x4, fixed_abs, tag = 'smem constant byte address 0x4 - core index']
  #allocation1 [shape = 'u32[144,128]{1,0:T(1,128)}', space=vmem, size = 0x12000, scoped, tag = 'internal scratch']
  #allocation2 [shape = 'f32[1]{0:T(128)S(6)}', space=smem, size = 0x200, scoped, tag = 'scoped memory for popularity_predictor.1']
  %s0 = inlined_call_operand.hbm [shape: f32[8,32], index: 0, kind: input, shape index: {}]
  %s1 = inlined_call_operand.vmem [shape: f32[1,32], index: 1, kind: input, shape index: {}]
  %s2 = inlined_call_operand.<no memory space> [shape: f32[1], index: 2, kind: input, shape index: {}]
  %s3 = inlined_call_operand.vmem [shape: f32[1,128], index: 3, kind: output, shape index: {}]
  %s4 = sld [smem:[#allocation0]]
  $region26: #{popularity_predictor.1} parent=0
    _
  %s6 = ssub.s32 1, %s4
  %s7 = scalar_select 0, %s6, %s4
  %8 = sst [smem:[#allocation2]] %s2
  $region1: #{popularity_predictor.1} parent=0
    #allocation3 [shape = 'u8[65536]{0}', space=vmem, size = 0x10000, scoped, tag = 'input window, operand 0, single buffered']
    #allocation4 [shape = 's32[1]{0}', space=sflag, size = 0x4, scoped, tag = 'scoped memory for popularity_predictor.1']
    %9 = vsyncpa [#allocation4], 0
    // Predicated region
    $region2: #{popularity_predictor.1} parent=1 // pred_check
      _
    $region3: #{popularity_predictor.1} parent=1 // pred_check_branch
      %11 = sbr.rel (0) target = $region5
    $region4: #{popularity_predictor.1} parent=1 // pred_region
      %s13 = ssub.s32 2048, 128
      %14 = vsyncadd [#allocation4], %s13
      %s15 = sshll.u32 [#allocation3], 4
      %s16 = int_to_ptr.vmem [resolvable:$true] %s15
      %21 = dma.hbm_to_vmem [thread:$0]  %s0, 128, %s16, [#allocation4], 128, 128, 8
    $region5: #{popularity_predictor.1} parent=1 // pred_fallthru
      _
    // Predicated region
    $region6: #{popularity_predictor.1} parent=1 // pred_check
      _
    $region7: #{popularity_predictor.1} parent=1 // pred_check_branch
      %23 = sbr.rel (0) target = $region9
    $region8: #{popularity_predictor.1} parent=1 // pred_region
      _
    $region9: #{popularity_predictor.1} parent=1 // pred_fallthru
      _
    // Predicated region
    $region10: #{popularity_predictor.1} parent=1 // pred_check
      _
    $region11: #{popularity_predictor.1} parent=1 // pred_check_branch
      %25 = sbr.rel (0) target = $region13
    $region12: #{popularity_predictor.1} parent=1 // pred_region
      _
    $region13: #{popularity_predictor.1} parent=1 // pred_fallthru
      _
    // Predicated region
    $region14: #{popularity_predictor.1} parent=1 // pred_check
      _
    $region15: #{popularity_predictor.1} parent=1 // pred_check_branch
      %27 = sbr.rel (0) target = $region17
    $region16: #{popularity_predictor.1} parent=1 // pred_region
      %28 = dma.done [#allocation4], 2048
    $region17: #{popularity_predictor.1} parent=1 // pred_fallthru
      _
    %v29 = vld [vmem:[%s1] sm:$0x1]
    %v30 = vld [vmem:[#allocation3] sm:$0xff]
    %v31 = vld [vmem:[#allocation3 + $0x8] sm:$0xff]
    %v32 = vld [vmem:[#allocation3 + $0x10] sm:$0xff]
    %v33 = vld [vmem:[#allocation3 + $0x18] sm:$0xff]
    %v34 = vld [vmem:[#allocation3 + $0x20] sm:$0xff]
    %v35 = vld [vmem:[#allocation3 + $0x28] sm:$0xff]
    %v36 = vld [vmem:[#allocation3 + $0x30] sm:$0xff]
    %v37 = vld [vmem:[#allocation3 + $0x38] sm:$0xff]
    %v38 = vld [vmem:[#allocation3 + $0x40] sm:$0xff]
    %v39 = vld [vmem:[#allocation3 + $0x48] sm:$0xff]
    %v40 = vld [vmem:[#allocation3 + $0x50] sm:$0xff]
    %v41 = vld [vmem:[#allocation3 + $0x58] sm:$0xff]
    %v42 = vld [vmem:[#allocation3 + $0x60] sm:$0xff]
    %v43 = vld [vmem:[#allocation3 + $0x68] sm:$0xff]
    %v44 = vld [vmem:[#allocation3 + $0x70] sm:$0xff]
    %v45 = vld [vmem:[#allocation3 + $0x78] sm:$0xff]
    %s46 = sld [smem:[#allocation2]]
    %v47 = vstv %s46
    %vm48 = vcmask 261120
    %v50 = vsel %vm48, %v29, 0
    %v53 = vsel %vm48, %v30, 0
    %v56 = vsel %vm48, %v31, 0
    %v59 = vsel %vm48, %v32, 0
    %v62 = vsel %vm48, %v33, 0
    %v65 = vsel %vm48, %v34, 0
    %v68 = vsel %vm48, %v35, 0
    %v71 = vsel %vm48, %v36, 0
    %v74 = vsel %vm48, %v37, 0
    %v77 = vsel %vm48, %v38, 0
    %v80 = vsel %vm48, %v39, 0
    %v83 = vsel %vm48, %v40, 0
    %v86 = vsel %vm48, %v41, 0
    %v89 = vsel %vm48, %v42, 0
    %v92 = vsel %vm48, %v43, 0
    %v95 = vsel %vm48, %v44, 0
    %v98 = vsel %vm48, %v45, 0
    %100 = vmatprep.subr.mxu0 0.0
    %101 = vmatpush1.xpose.msra.mxu0 %v98
    %102 = vmatprep.subr.mxu0 0.0
    %103 = vmatpush1.xpose.msra.mxu0 %v95
    %104 = vmatprep.subr.mxu0 0.0
    %105 = vmatpush1.xpose.msra.mxu0 %v92
    %106 = vmatprep.subr.mxu0 0.0
    %107 = vmatpush1.xpose.msra.mxu0 %v89
    %108 = vmatprep.subr.mxu0 0.0
    %109 = vmatpush1.xpose.msra.mxu0 %v86
    %110 = vmatprep.subr.mxu0 0.0
    %111 = vmatpush1.xpose.msra.mxu0 %v83
    %112 = vmatprep.subr.mxu0 0.0
    %113 = vmatpush1.xpose.msra.mxu0 %v80
    %114 = vmatprep.subr.mxu0 0.0
    %115 = vmatpush1.xpose.msra.mxu0 %v77
    %116 = vmatprep.subr.mxu0 0.0
    %117 = vmatpush1.xpose.msra.mxu0 %v74
    %118 = vmatprep.subr.mxu0 0.0
    %119 = vmatpush1.xpose.msra.mxu0 %v71
    %120 = vmatprep.subr.mxu0 0.0
    %121 = vmatpush1.xpose.msra.mxu0 %v68
    %122 = vmatprep.subr.mxu0 0.0
    %123 = vmatpush1.xpose.msra.mxu0 %v65
    %124 = vmatprep.subr.mxu0 0.0
    %125 = vmatpush1.xpose.msra.mxu0 %v62
    %126 = vmatprep.subr.mxu0 0.0
    %127 = vmatpush1.xpose.msra.mxu0 %v59
    %128 = vmatprep.subr.mxu0 0.0
    %129 = vmatpush1.xpose.msra.mxu0 %v56
    %130 = vmatprep.subr.mxu0 0.0
    %131 = vmatpush1.xpose.msra.mxu0 %v53
    %132 = vmatprep.subr.mxu0 0.0
    %133 = vmatpush2.xpose.msra.mxu0 0.0
    %134 = vmatprep.subr.mxu0 0.0
    %135 = vmatpush2.xpose.msra.mxu0 0.0
    %136 = vmatprep.subr.mxu0 0.0
    %137 = vmatpush2.xpose.msra.mxu0 0.0
    %138 = vmatprep.subr.mxu0 0.0
    %139 = vmatpush2.xpose.msra.mxu0 0.0
    %140 = vmatprep.subr.mxu0 0.0
    %141 = vmatpush2.xpose.msra.mxu0 0.0
    %142 = vmatprep.subr.mxu0 0.0
    %143 = vmatpush2.xpose.msra.mxu0 0.0
    %144 = vmatprep.subr.mxu0 0.0
    %145 = vmatpush2.xpose.msra.mxu0 0.0
    %146 = vmatprep.subr.mxu0 0.0
    %147 = vmatpush2.xpose.msra.mxu0 0.0
    %148 = vmatprep.subr.mxu0 0.0
    %149 = vmatpush2.xpose.msra.mxu0 0.0
    %150 = vmatprep.subr.mxu0 0.0
    %151 = vmatpush2.xpose.msra.mxu0 0.0
    %152 = vmatprep.subr.mxu0 0.0
    %153 = vmatpush2.xpose.msra.mxu0 0.0
    %154 = vmatprep.subr.mxu0 0.0
    %155 = vmatpush2.xpose.msra.mxu0 0.0
    %156 = vmatprep.subr.mxu0 0.0
    %157 = vmatpush2.xpose.msra.mxu0 0.0
    %158 = vmatprep.subr.mxu0 0.0
    %159 = vmatpush2.xpose.msra.mxu0 0.0
    %160 = vmatprep.subr.mxu0 0.0
    %161 = vmatpush2.xpose.msra.mxu0 0.0
    %162 = vmatprep.subr.mxu0 0.0
    %163 = vmatpush2.xpose.msra.mxu0 0.0
    %164 = vmatprep.mubr.f32.mxu0 0.0
    %165 = vmatmul.mubr.f32.gmra.mxu0 %v50
    %v166 = vpop.f32.mrf.mxu0
    %v167 = vadd.f32 %v47, %v166
    %v168 = vpop.f32.mrf.mxu0
    %169 = vdwg.mxu0
    %170 = vst [vmem:[%s3] sm:$0x1] %v167
    // Predicated region
    $region18: #{popularity_predictor.1} parent=1 // pred_check
      _
    $region19: #{popularity_predictor.1} parent=1 // pred_check_branch
      %172 = sbr.rel (0) target = $region21
    $region20: #{popularity_predictor.1} parent=1 // pred_region
      _
    $region21: #{popularity_predictor.1} parent=1 // pred_fallthru
      _
    // Predicated region
    $region22: #{popularity_predictor.1} parent=1 // pred_check
      _
    $region23: #{popularity_predictor.1} parent=1 // pred_check_branch
      %174 = sbr.rel (0) target = $region25
    $region24: #{popularity_predictor.1} parent=1 // pred_region
      _
    $region25: #{popularity_predictor.1} parent=1 // pred_fallthru
      _
    %175 = vsyncpa [#allocation4], 1

</llo_original>
